<compile_context>
chip_gen: v7x
topology: tpu7x:2x2x1
jax: 0.10.0
libtpu: 0.0.40
codegen_flags: <defaults>
</compile_context>

<pallas_src>
import functools

import jax
import jax.numpy as jnp
from jax.experimental import pallas as pl
from jax.experimental.pallas import tpu as pltpu

_BN_EPS = 1e-5


def _round_up(n: int, m: int) -> int:
    return ((n + m - 1) // m) * m


def _pad2d(a, rows, cols, dtype):
    """Cast + zero-pad to (rows, cols); emits NO pad/copy op if already aligned."""
    a = a.astype(dtype)
    if a.shape == (rows, cols):
        return a
    return jnp.zeros((rows, cols), dtype).at[: a.shape[0], : a.shape[1]].set(a)


def _pad_vec(v, n, fill):
    v = v.astype(jnp.float32).reshape(1, -1)
    if v.shape[1] == n:
        return v
    return jnp.full((1, n), fill, jnp.float32).at[:, : v.shape[1]].set(v)


def _vmem_limit_bytes() -> int:
    """~3/4 of physical VMEM (96 MiB on 128-MiB chips, 48 MiB on v7x's 64 MiB)."""
    cap = None
    try:
        info = pltpu.get_tpu_info()
        for name in ("vmem_capacity_bytes", "vmem_size_bytes", "vmem_bytes"):
            if hasattr(info, name):
                cap = int(getattr(info, name))
                break
    except Exception:
        cap = None
    if cap is None:
        cap = 64 * 1024 * 1024  # conservative (v7x-safe) fallback
    return int(min(max(cap * 3 // 4, 32 * 1024 * 1024), 100 * 1024 * 1024))


def _fused_head_kernel(x_ref, w1_ref, w2_ref, g1_ref, b1_ref, g2_ref, b2_ref,
                       o_ref, y1_acc, y2_acc, *, eps: float, n_batch: int,
                       b_pad: int, k_tiles: int, h_tiles: int):
    """Grid (H-tiles, K-tiles), K innermost.

    Per H tile: accumulate y1[:, h-slab] over K, then BN1+ReLU on the slab
    (BN1 stats are per-feature over the batch, so the slab is self-contained)
    and accumulate the layer-2 partial product into y2_acc. BN2 runs once on
    the final grid step.
    """
    h = pl.program_id(0)
    k = pl.program_id(1)
    inv_n = 1.0 / float(n_batch)

    @pl.when(k == 0)
    def _():
        y1_acc[...] = jnp.zeros_like(y1_acc)

    @pl.when((h == 0) & (k == 0))
    def _():
        y2_acc[...] = jnp.zeros_like(y2_acc)

    # Layer-1 partial matmul for this (H-tile, K-tile): MXU, f32 accumulation.
    y1_acc[...] += jnp.dot(x_ref[...], w1_ref[...],
                           preferred_element_type=jnp.float32)

    @pl.when(k == k_tiles - 1)
    def _():
        # --- BN1 (training mode, biased variance) + ReLU on this column slab. ---
        # One-pass stats: padded batch rows of y1 are exactly zero, so they add
        # nothing to sum / sum-of-squares; divide by the TRUE batch size.
        y1 = y1_acc[...]
        mean1 = jnp.sum(y1, axis=0, keepdims=True) * inv_n
        msq1 = jnp.sum(y1 * y1, axis=0, keepdims=True) * inv_n
        var1 = msq1 - mean1 * mean1
        act = jnp.maximum(
            (y1 - mean1) * jax.lax.rsqrt(var1 + eps) * g1_ref[...] + b1_ref[...],
            0.0)
        if b_pad != n_batch:
            # BN1(0)+ReLU of a padded row is NOT zero -> zero it so it stays out
            # of the layer-2 matmul and the BN2 statistics.
            row = jax.lax.broadcasted_iota(jnp.int32, (b_pad, 1), 0)
            act = jnp.where(row < n_batch, act, 0.0)

        # --- Layer-2 partial matmul, accumulated across H tiles. ---
        y2_acc[...] += jnp.dot(act.astype(w2_ref.dtype), w2_ref[...],
                               preferred_element_type=jnp.float32)

    @pl.when((h == h_tiles - 1) & (k == k_tiles - 1))
    def _():
        # --- Final BN2 (no activation). Padded rows of y2 are exactly zero. ---
        y2 = y2_acc[...]
        mean2 = jnp.sum(y2, axis=0, keepdims=True) * inv_n
        msq2 = jnp.sum(y2 * y2, axis=0, keepdims=True) * inv_n
        var2 = msq2 - mean2 * mean2
        o_ref[...] = ((y2 - mean2) * jax.lax.rsqrt(var2 + eps) * g2_ref[...]
                      + b2_ref[...]).astype(o_ref.dtype)


def prepare_params(params, *, compute_dtype=jnp.bfloat16):
    """Pad/cast the loop-invariant weights ONCE (outside the per-step call)."""
    w1_t, w2_t = params["w1_t"], params["w2_t"]
    d_in, d_hid = w1_t.shape
    d_out = w2_t.shape[1]
    din_p = _round_up(d_in, 128)
    h_p = _round_up(d_hid, 128)
    o_p = _round_up(d_out, 128)
    return {
        "w1_p": _pad2d(w1_t, din_p, h_p, compute_dtype),
        "w2_p": _pad2d(w2_t, h_p, o_p, compute_dtype),
        "g1_p": _pad_vec(params["g1"], h_p, 1.0),
        "b1_p": _pad_vec(params["b1"], h_p, 0.0),
        "g2_p": _pad_vec(params["g2"], o_p, 1.0),
        "b2_p": _pad_vec(params["b2"], o_p, 0.0),
        "dims": (d_in, d_hid, d_out),
        "compute_dtype": jnp.dtype(compute_dtype),
    }


def simclr_projection_head(x, prepared, *, eps=_BN_EPS):
    """x: (B, input_dim) -> (B, output_dim). Training-mode BatchNorm statistics."""
    w1_p, w2_p = prepared["w1_p"], prepared["w2_p"]
    g1_p, b1_p = prepared["g1_p"], prepared["b1_p"]
    g2_p, b2_p = prepared["g2_p"], prepared["b2_p"]
    _, _, d_out = prepared["dims"]
    cdt = prepared["compute_dtype"]

    B = x.shape[0]
    din_p, h_p = w1_p.shape
    o_p = w2_p.shape[1]

    # bf16 vregs pack 16 sublanes; f32 packs 8.
    sub = 16 if jnp.dtype(cdt).itemsize == 2 else 8
    b_p = _round_up(B, sub)
    x_p = _pad2d(x, b_p, din_p, cdt)

    # Reduction tile (layer-1 K) and hidden tile (BN1 slab / layer-2 K).
    tk = 256 if din_p % 256 == 0 else 128
    th = next(t for t in (512, 256, 128) if h_p % t == 0)
    k_tiles = din_p // tk
    h_tiles = h_p // th

    kernel = functools.partial(_fused_head_kernel, eps=eps, n_batch=B,
                               b_pad=b_p, k_tiles=k_tiles, h_tiles=h_tiles)

    itemsize = jnp.dtype(cdt).itemsize
    cost = pl.CostEstimate(
        flops=2 * b_p * din_p * h_p + 2 * b_p * h_p * o_p,
        transcendentals=h_p + o_p,
        bytes_accessed=(h_tiles * x_p.size + w1_p.size + w2_p.size) * itemsize
        + (g1_p.size + b1_p.size + g2_p.size + b2_p.size + b_p * o_p) * 4,
    )

    out_p = pl.pallas_call(
        kernel,
        out_shape=jax.ShapeDtypeStruct((b_p, o_p), jnp.float32),
        grid_spec=pltpu.PrefetchScalarGridSpec(
            num_scalar_prefetch=0,
            grid=(h_tiles, k_tiles),                           # K innermost
            in_specs=[
                pl.BlockSpec((b_p, tk), lambda h, k: (0, k)),  # x   (K-tiled)
                pl.BlockSpec((tk, th), lambda h, k: (k, h)),   # W1  (K,H-tiled)
                pl.BlockSpec((th, o_p), lambda h, k: (h, 0)),  # W2  (H-streamed)
                pl.BlockSpec((1, th), lambda h, k: (0, h)),    # gamma1
                pl.BlockSpec((1, th), lambda h, k: (0, h)),    # beta1
                pl.BlockSpec((1, o_p), lambda h, k: (0, 0)),   # gamma2 (resident)
                pl.BlockSpec((1, o_p), lambda h, k: (0, 0)),   # beta2  (resident)
            ],
            out_specs=pl.BlockSpec((b_p, o_p), lambda h, k: (0, 0)),
            scratch_shapes=[
                pltpu.VMEM((b_p, th), jnp.float32),   # layer-1 acc (one H slab)
                pltpu.VMEM((b_p, o_p), jnp.float32),  # layer-2 acc
            ],
        ),
        compiler_params=pltpu.CompilerParams(
            # Both axes are reductions w.r.t. the resident output block.
            dimension_semantics=("arbitrary", "arbitrary"),
            vmem_limit_bytes=_vmem_limit_bytes(),
        ),
        cost_estimate=cost,
    )(x_p, w1_p, w2_p, g1_p, b1_p, g2_p, b2_p)

    if b_p == B and o_p == d_out:
        return out_p
    return out_p[:B, :d_out]


def init_params(key, input_dim, hidden_dim, output_dim):
    """PyTorch-default-like init: Linear weights ~ U(-1/sqrt(fan_in), 1/sqrt(fan_in))."""
    k1, k2 = jax.random.split(key)
    bound1 = 1.0 / jnp.sqrt(input_dim)
    bound2 = 1.0 / jnp.sqrt(hidden_dim)
    # Stored pre-transposed as (in, out) so the kernel computes x @ W_t directly.
    w1_t = jax.random.uniform(k1, (input_dim, hidden_dim), jnp.float32, -bound1, bound1)
    w2_t = jax.random.uniform(k2, (hidden_dim, output_dim), jnp.float32, -bound2, bound2)
    return {
        "w1_t": w1_t,
        "g1": jnp.ones((hidden_dim,), jnp.float32),
        "b1": jnp.zeros((hidden_dim,), jnp.float32),
        "w2_t": w2_t,
        "g2": jnp.ones((output_dim,), jnp.float32),
        "b2": jnp.zeros((output_dim,), jnp.float32),
    }


def _reference(x, params, eps=_BN_EPS):
    """Pure-JAX f32 reference (training-mode BN, biased variance)."""
    def bn(y, g, b):
        m = jnp.mean(y, axis=0, keepdims=True)
        v = jnp.mean(jnp.square(y - m), axis=0, keepdims=True)
        return (y - m) / jnp.sqrt(v + eps) * g + b

    h = jnp.maximum(bn(x @ params["w1_t"], params["g1"], params["b1"]), 0.0)
    return bn(h @ params["w2_t"], params["g2"], params["b2"])


if __name__ == "__main__":
    # Small shapes consistent with the module: batch=8, input_dim=32,
    # hidden_dim=32, output_dim=16 (num_layers=2, batch_norm=True).
    batch, input_dim, hidden_dim, output_dim = 8, 32, 32, 16

    key = jax.random.PRNGKey(0)
    kx, kp = jax.random.split(key)
    x = jax.random.normal(kx, (batch, input_dim), jnp.float32)
    params = init_params(kp, input_dim, hidden_dim, output_dim)
    ref = _reference(x, params)

    # Default bf16 MXU path (f32 accumulation + f32 BN math). bf16 quantization
    # of x/W1/W2 costs ~0.5% relative error -> loose tolerance, fine for SimCLR.
    prep_bf16 = prepare_params(params)
    out = jax.block_until_ready(simclr_projection_head(x, prep_bf16))
    assert out.shape == (batch, output_dim)
    assert jnp.allclose(out, ref, atol=1e-1, rtol=1e-1)

    # f32 compute path: near-exact check against the pure-JAX reference.
    prep_f32 = prepare_params(params, compute_dtype=jnp.float32)
    out_f32 = jax.block_until_ready(simclr_projection_head(x, prep_f32))
    assert jnp.allclose(out_f32, ref, atol=1e-4, rtol=1e-4)

    # Batch not a multiple of the sublane alignment: exercises the row-mask path.
    x6 = x[:6]
    out6 = jax.block_until_ready(simclr_projection_head(x6, prep_f32))
    assert jnp.allclose(out6, _reference(x6, params), atol=1e-4, rtol=1e-4)

    print("KERNEL_OK")
</pallas_src>

<mosaic_0001>
module attributes {stable_mosaic.version = 11 : i64} {
  func.func @_fused_head_kernel(%arg0: i32, %arg1: i32, %arg2: memref<16x128xbf16, #tpu.memory_space<vmem>>, %arg3: memref<128x128xbf16, #tpu.memory_space<vmem>>, %arg4: memref<128x128xbf16, #tpu.memory_space<vmem>>, %arg5: memref<1x128xf32, #tpu.memory_space<vmem>>, %arg6: memref<1x128xf32, #tpu.memory_space<vmem>>, %arg7: memref<1x128xf32, #tpu.memory_space<vmem>>, %arg8: memref<1x128xf32, #tpu.memory_space<vmem>>, %arg9: memref<16x128xf32, #tpu.memory_space<vmem>>, %arg10: memref<16x128xf32, #tpu.memory_space<vmem>>, %arg11: memref<16x128xf32, #tpu.memory_space<vmem>>) attributes {dimension_semantics = [#tpu.dimension_semantics<arbitrary>, #tpu.dimension_semantics<arbitrary>], iteration_bounds = array<i64: 1, 1>, scalar_prefetch = 0 : i64, scratch_operands = 2 : i64, tpu.core_type = #tpu.core_type<tc>, window_params = [{transform_indices = @transform_0, window_bounds = array<i64: 16, 128>}, {transform_indices = @transform_1, window_bounds = array<i64: 128, 128>}, {transform_indices = @transform_2, window_bounds = array<i64: 128, 128>}, {transform_indices = @transform_3, window_bounds = array<i64: 1, 128>}, {transform_indices = @transform_4, window_bounds = array<i64: 1, 128>}, {pipeline_mode = #tpu.pipeline_mode<synchronous>, transform_indices = @transform_5, window_bounds = array<i64: 1, 128>}, {pipeline_mode = #tpu.pipeline_mode<synchronous>, transform_indices = @transform_6, window_bounds = array<i64: 1, 128>}, {pipeline_mode = #tpu.pipeline_mode<synchronous>, transform_indices = @transform_7, window_bounds = array<i64: 16, 128>}]} {
    %c0_i32 = arith.constant 0 : i32
    %0 = arith.cmpi eq, %arg1, %c0_i32 : i32
    %1 = arith.extui %0 : i1 to i32
    %c0_i32_0 = arith.constant 0 : i32
    %2 = arith.cmpi ne, %1, %c0_i32_0 : i32
    scf.if %2 {
      %cst_16 = arith.constant 0.000000e+00 : f32
      %22 = vector.broadcast %cst_16 : f32 to vector<16x128xf32>
      %c0_17 = arith.constant 0 : index
      %c0_18 = arith.constant 0 : index
      %23 = vector.load %arg10[%c0_17, %c0_18] : memref<16x128xf32, #tpu.memory_space<vmem>>, vector<16x128xf32>
      tpu.vector_store %arg10[%c0_17, %c0_18], %22 {strides = array<i32>} : memref<16x128xf32, #tpu.memory_space<vmem>>, vector<16x128xf32>,
    } else {
    }
    %c0_i32_1 = arith.constant 0 : i32
    %3 = arith.cmpi eq, %arg0, %c0_i32_1 : i32
    %c0_i32_2 = arith.constant 0 : i32
    %4 = arith.cmpi eq, %arg1, %c0_i32_2 : i32
    %5 = arith.andi %3, %4 : i1
    %6 = arith.extui %5 : i1 to i32
    %c0_i32_3 = arith.constant 0 : i32
    %7 = arith.cmpi ne, %6, %c0_i32_3 : i32
    scf.if %7 {
      %cst_16 = arith.constant 0.000000e+00 : f32
      %22 = vector.broadcast %cst_16 : f32 to vector<16x128xf32>
      %c0_17 = arith.constant 0 : index
      %c0_18 = arith.constant 0 : index
      %23 = vector.load %arg11[%c0_17, %c0_18] : memref<16x128xf32, #tpu.memory_space<vmem>>, vector<16x128xf32>
      tpu.vector_store %arg11[%c0_17, %c0_18], %22 {strides = array<i32>} : memref<16x128xf32, #tpu.memory_space<vmem>>, vector<16x128xf32>,
    } else {
    }
    %c0 = arith.constant 0 : index
    %c0_4 = arith.constant 0 : index
    %8 = vector.load %arg10[%c0, %c0_4] : memref<16x128xf32, #tpu.memory_space<vmem>>, vector<16x128xf32>
    %c0_5 = arith.constant 0 : index
    %c0_6 = arith.constant 0 : index
    %9 = vector.load %arg2[%c0_5, %c0_6] : memref<16x128xbf16, #tpu.memory_space<vmem>>, vector<16x128xbf16>
    %c0_7 = arith.constant 0 : index
    %c0_8 = arith.constant 0 : index
    %10 = vector.load %arg3[%c0_7, %c0_8] : memref<128x128xbf16, #tpu.memory_space<vmem>>, vector<128x128xbf16>
    %cst = arith.constant dense<0.000000e+00> : vector<16x128xf32>
    %11 = tpu.matmul %9, %10, %cst {dimension_numbers = #tpu.dot_dimension_numbers<[1], [0], [0], [1], [0, 0, 1, 1], [], []>} : vector<16x128xbf16>, vector<128x128xbf16>, vector<16x128xf32> -> vector<16x128xf32>
    %12 = arith.addf %8, %11 : vector<16x128xf32>
    %c0_9 = arith.constant 0 : index
    %c0_10 = arith.constant 0 : index
    %13 = vector.load %arg10[%c0_9, %c0_10] : memref<16x128xf32, #tpu.memory_space<vmem>>, vector<16x128xf32>
    tpu.vector_store %arg10[%c0_9, %c0_10], %12 {strides = array<i32>} : memref<16x128xf32, #tpu.memory_space<vmem>>, vector<16x128xf32>,
    %c0_i32_11 = arith.constant 0 : i32
    %14 = arith.cmpi eq, %arg1, %c0_i32_11 : i32
    %15 = arith.extui %14 : i1 to i32
    %c0_i32_12 = arith.constant 0 : i32
    %16 = arith.cmpi ne, %15, %c0_i32_12 : i32
    scf.if %16 {
      %c0_16 = arith.constant 0 : index
      %c0_17 = arith.constant 0 : index
      %22 = vector.load %arg10[%c0_16, %c0_17] : memref<16x128xf32, #tpu.memory_space<vmem>>, vector<16x128xf32>
      %cst_18 = arith.constant dense<0.000000e+00> : vector<128xf32>
      %23 = vector.multi_reduction <add>, %22, %cst_18 [0] : vector<16x128xf32> to vector<128xf32>
      %24 = vector.shape_cast %23 : vector<128xf32> to vector<1x128xf32>
      %cst_19 = arith.constant 1.250000e-01 : f32
      %25 = vector.broadcast %cst_19 : f32 to vector<1x128xf32>
      %26 = arith.mulf %24, %25 : vector<1x128xf32>
      %27 = arith.mulf %22, %22 : vector<16x128xf32>
      %cst_20 = arith.constant dense<0.000000e+00> : vector<128xf32>
      %28 = vector.multi_reduction <add>, %27, %cst_20 [0] : vector<16x128xf32> to vector<128xf32>
      %29 = vector.shape_cast %28 : vector<128xf32> to vector<1x128xf32>
      %cst_21 = arith.constant 1.250000e-01 : f32
      %30 = vector.broadcast %cst_21 : f32 to vector<1x128xf32>
      %31 = arith.mulf %29, %30 : vector<1x128xf32>
      %32 = arith.mulf %26, %26 : vector<1x128xf32>
      %33 = arith.subf %31, %32 : vector<1x128xf32>
      %34 = vector.broadcast %26 : vector<1x128xf32> to vector<16x128xf32>
      %35 = arith.subf %22, %34 : vector<16x128xf32>
      %cst_22 = arith.constant 9.99999974E-6 : f32
      %36 = vector.broadcast %cst_22 : f32 to vector<1x128xf32>
      %37 = arith.addf %33, %36 : vector<1x128xf32>
      %38 = math.rsqrt %37 : vector<1x128xf32>
      %39 = vector.broadcast %38 : vector<1x128xf32> to vector<16x128xf32>
      %40 = arith.mulf %35, %39 : vector<16x128xf32>
      %c0_23 = arith.constant 0 : index
      %c0_24 = arith.constant 0 : index
      %41 = vector.load %arg5[%c0_23, %c0_24] : memref<1x128xf32, #tpu.memory_space<vmem>>, vector<1x128xf32>
      %42 = vector.broadcast %41 : vector<1x128xf32> to vector<16x128xf32>
      %43 = arith.mulf %40, %42 : vector<16x128xf32>
      %c0_25 = arith.constant 0 : index
      %c0_26 = arith.constant 0 : index
      %44 = vector.load %arg6[%c0_25, %c0_26] : memref<1x128xf32, #tpu.memory_space<vmem>>, vector<1x128xf32>
      %45 = vector.broadcast %44 : vector<1x128xf32> to vector<16x128xf32>
      %46 = arith.addf %43, %45 : vector<16x128xf32>
      %cst_27 = arith.constant 0.000000e+00 : f32
      %47 = vector.broadcast %cst_27 : f32 to vector<16x128xf32>
      %48 = arith.maximumf %46, %47 : vector<16x128xf32>
      %49 = tpu.iota {dimensions = array<i32: 0>} : vector<16x1xi32>
      %c8_i32 = arith.constant 8 : i32
      %50 = vector.broadcast %c8_i32 : i32 to vector<16x1xi32>
      %51 = arith.cmpi slt, %49, %50 : vector<16x1xi32>
      %cst_28 = arith.constant 0.000000e+00 : f32
      %52 = vector.shape_cast %51 : vector<16x1xi1> to vector<16x1xi1>
      %53 = vector.broadcast %52 : vector<16x1xi1> to vector<16x128xi1>
      %54 = vector.broadcast %cst_28 : f32 to vector<16x128xf32>
      %55 = arith.select %53, %48, %54 : vector<16x128xi1>, vector<16x128xf32>
      %c0_29 = arith.constant 0 : index
      %c0_30 = arith.constant 0 : index
      %56 = vector.load %arg11[%c0_29, %c0_30] : memref<16x128xf32, #tpu.memory_space<vmem>>, vector<16x128xf32>
      %57 = arith.truncf %55 : vector<16x128xf32> to vector<16x128xbf16>
      %c0_31 = arith.constant 0 : index
      %c0_32 = arith.constant 0 : index
      %58 = vector.load %arg4[%c0_31, %c0_32] : memref<128x128xbf16, #tpu.memory_space<vmem>>, vector<128x128xbf16>
      %cst_33 = arith.constant dense<0.000000e+00> : vector<16x128xf32>
      %59 = tpu.matmul %57, %58, %cst_33 {dimension_numbers = #tpu.dot_dimension_numbers<[1], [0], [0], [1], [0, 0, 1, 1], [], []>} : vector<16x128xbf16>, vector<128x128xbf16>, vector<16x128xf32> -> vector<16x128xf32>
      %60 = arith.addf %56, %59 : vector<16x128xf32>
      %c0_34 = arith.constant 0 : index
      %c0_35 = arith.constant 0 : index
      %61 = vector.load %arg11[%c0_34, %c0_35] : memref<16x128xf32, #tpu.memory_space<vmem>>, vector<16x128xf32>
      tpu.vector_store %arg11[%c0_34, %c0_35], %60 {strides = array<i32>} : memref<16x128xf32, #tpu.memory_space<vmem>>, vector<16x128xf32>,
    } else {
    }
    %c0_i32_13 = arith.constant 0 : i32
    %17 = arith.cmpi eq, %arg0, %c0_i32_13 : i32
    %c0_i32_14 = arith.constant 0 : i32
    %18 = arith.cmpi eq, %arg1, %c0_i32_14 : i32
    %19 = arith.andi %17, %18 : i1
    %20 = arith.extui %19 : i1 to i32
    %c0_i32_15 = arith.constant 0 : i32
    %21 = arith.cmpi ne, %20, %c0_i32_15 : i32
    scf.if %21 {
      %c0_16 = arith.constant 0 : index
      %c0_17 = arith.constant 0 : index
      %22 = vector.load %arg11[%c0_16, %c0_17] : memref<16x128xf32, #tpu.memory_space<vmem>>, vector<16x128xf32>
      %cst_18 = arith.constant dense<0.000000e+00> : vector<128xf32>
      %23 = vector.multi_reduction <add>, %22, %cst_18 [0] : vector<16x128xf32> to vector<128xf32>
      %24 = vector.shape_cast %23 : vector<128xf32> to vector<1x128xf32>
      %cst_19 = arith.constant 1.250000e-01 : f32
      %25 = vector.broadcast %cst_19 : f32 to vector<1x128xf32>
      %26 = arith.mulf %24, %25 : vector<1x128xf32>
      %27 = arith.mulf %22, %22 : vector<16x128xf32>
      %cst_20 = arith.constant dense<0.000000e+00> : vector<128xf32>
      %28 = vector.multi_reduction <add>, %27, %cst_20 [0] : vector<16x128xf32> to vector<128xf32>
      %29 = vector.shape_cast %28 : vector<128xf32> to vector<1x128xf32>
      %cst_21 = arith.constant 1.250000e-01 : f32
      %30 = vector.broadcast %cst_21 : f32 to vector<1x128xf32>
      %31 = arith.mulf %29, %30 : vector<1x128xf32>
      %32 = arith.mulf %26, %26 : vector<1x128xf32>
      %33 = arith.subf %31, %32 : vector<1x128xf32>
      %34 = vector.broadcast %26 : vector<1x128xf32> to vector<16x128xf32>
      %35 = arith.subf %22, %34 : vector<16x128xf32>
      %cst_22 = arith.constant 9.99999974E-6 : f32
      %36 = vector.broadcast %cst_22 : f32 to vector<1x128xf32>
      %37 = arith.addf %33, %36 : vector<1x128xf32>
      %38 = math.rsqrt %37 : vector<1x128xf32>
      %39 = vector.broadcast %38 : vector<1x128xf32> to vector<16x128xf32>
      %40 = arith.mulf %35, %39 : vector<16x128xf32>
      %c0_23 = arith.constant 0 : index
      %c0_24 = arith.constant 0 : index
      %41 = vector.load %arg7[%c0_23, %c0_24] : memref<1x128xf32, #tpu.memory_space<vmem>>, vector<1x128xf32>
      %42 = vector.broadcast %41 : vector<1x128xf32> to vector<16x128xf32>
      %43 = arith.mulf %40, %42 : vector<16x128xf32>
      %c0_25 = arith.constant 0 : index
      %c0_26 = arith.constant 0 : index
      %44 = vector.load %arg8[%c0_25, %c0_26] : memref<1x128xf32, #tpu.memory_space<vmem>>, vector<1x128xf32>
      %45 = vector.broadcast %44 : vector<1x128xf32> to vector<16x128xf32>
      %46 = arith.addf %43, %45 : vector<16x128xf32>
      %c0_27 = arith.constant 0 : index
      %c0_28 = arith.constant 0 : index
      %47 = vector.load %arg9[%c0_27, %c0_28] : memref<16x128xf32, #tpu.memory_space<vmem>>, vector<16x128xf32>
      tpu.vector_store %arg9[%c0_27, %c0_28], %46 {strides = array<i32>} : memref<16x128xf32, #tpu.memory_space<vmem>>, vector<16x128xf32>,
    } else {
    }
    return
  }
  func.func @transform_0(%arg0: i32, %arg1: i32) -> (i32, i32) {
    %c0_i32 = arith.constant 0 : i32
    %c0_i32_0 = arith.constant 0 : i32
    return %c0_i32, %arg1 : i32, i32
  }
  func.func @transform_1(%arg0: i32, %arg1: i32) -> (i32, i32) {
    %c0_i32 = arith.constant 0 : i32
    return %arg1, %arg0 : i32, i32
  }
  func.func @transform_2(%arg0: i32, %arg1: i32) -> (i32, i32) {
    %c0_i32 = arith.constant 0 : i32
    %c0_i32_0 = arith.constant 0 : i32
    return %arg0, %c0_i32 : i32, i32
  }
  func.func @transform_3(%arg0: i32, %arg1: i32) -> (i32, i32) {
    %c0_i32 = arith.constant 0 : i32
    %c0_i32_0 = arith.constant 0 : i32
    return %c0_i32, %arg0 : i32, i32
  }
  func.func @transform_4(%arg0: i32, %arg1: i32) -> (i32, i32) {
    %c0_i32 = arith.constant 0 : i32
    %c0_i32_0 = arith.constant 0 : i32
    return %c0_i32, %arg0 : i32, i32
  }
  func.func @transform_5(%arg0: i32, %arg1: i32) -> (i32, i32) {
    %c0_i32 = arith.constant 0 : i32
    %c0_i32_0 = arith.constant 0 : i32
    %c0_i32_1 = arith.constant 0 : i32
    return %c0_i32, %c0_i32_0 : i32, i32
  }
  func.func @transform_6(%arg0: i32, %arg1: i32) -> (i32, i32) {
    %c0_i32 = arith.constant 0 : i32
    %c0_i32_0 = arith.constant 0 : i32
    %c0_i32_1 = arith.constant 0 : i32
    return %c0_i32, %c0_i32_0 : i32, i32
  }
  func.func @transform_7(%arg0: i32, %arg1: i32) -> (i32, i32) {
    %c0_i32 = arith.constant 0 : i32
    %c0_i32_0 = arith.constant 0 : i32
    %c0_i32_1 = arith.constant 0 : i32
    return %c0_i32, %c0_i32_0 : i32, i32
  }
}

</mosaic_0001>

<llo_original>
// kernel: tpu_custom_call.1
$region0: #{tpu_custom_call.1}
  #allocation0 [shape = 'u32[]', space=smem, size = 0x4, offset = 0x4, fixed_abs, tag = 'smem constant byte address 0x4 - core index']
  #allocation1 [shape = 'u32[144,128]{1,0:T(1,128)}', space=vmem, size = 0x12000, scoped, tag = 'internal scratch']
  #allocation2 [shape = 'f32[16,128]{1,0:T(8,128)}', space=vmem, size = 0x2000, scoped, tag = 'scratch operand']
  #allocation3 [shape = 'f32[16,128]{1,0:T(8,128)}', space=vmem, size = 0x2000, scoped, tag = 'scratch operand']
  %s0 = inlined_call_operand.hbm [shape: bf16[16,128], index: 0, kind: input, shape index: {}]
  %s1 = inlined_call_operand.hbm [shape: bf16[128,128], index: 1, kind: input, shape index: {}]
  %s2 = inlined_call_operand.hbm [shape: bf16[128,128], index: 2, kind: input, shape index: {}]
  %s3 = inlined_call_operand.vmem [shape: f32[1,128], index: 3, kind: input, shape index: {}]
  %s4 = inlined_call_operand.vmem [shape: f32[1,128], index: 4, kind: input, shape index: {}]
  %s5 = inlined_call_operand.vmem [shape: f32[1,128], index: 5, kind: input, shape index: {}]
  %s6 = inlined_call_operand.vmem [shape: f32[1,128], index: 6, kind: input, shape index: {}]
  %s7 = inlined_call_operand.hbm [shape: f32[16,128], index: 7, kind: output, shape index: {}]
  %s8 = sld [smem:[#allocation0]]
  $region66: #{tpu_custom_call.1} parent=0
    _
  %s10 = ssub.s32 1, %s8
  %s11 = scalar_select 0, %s10, %s8
  $region1: #{tpu_custom_call.1} parent=0
    #allocation4 [shape = 'u8[4096]{0}', space=vmem, size = 0x1000, scoped, tag = 'input window, operand 0, single buffered']
    #allocation5 [shape = 's32[1]{0}', space=sflag, size = 0x4, scoped, tag = 'scoped memory for tpu_custom_call.1']
    #allocation6 [shape = 's32[1]{0}', space=sflag, size = 0x4, scoped, tag = 'scoped memory for tpu_custom_call.1']
    #allocation7 [shape = 'u8[32768]{0}', space=vmem, size = 0x8000, scoped, tag = 'input window, operand 1, single buffered']
    #allocation8 [shape = 's32[1]{0}', space=sflag, size = 0x4, scoped, tag = 'scoped memory for tpu_custom_call.1']
    #allocation9 [shape = 'u8[32768]{0}', space=vmem, size = 0x8000, scoped, tag = 'input window, operand 2, single buffered']
    #allocation10 [shape = 'u8[8192]{0}', space=vmem, size = 0x2000, scoped, tag = 'output window, operand 0, single buffered']
    %12 = vsyncpa [#allocation5], 0
    %13 = vsyncpa [#allocation8], 0
    %14 = vsyncpa [#allocation6], 0
    // Predicated region
    $region2: #{tpu_custom_call.1} parent=1 // pred_check
      _
    $region3: #{tpu_custom_call.1} parent=1 // pred_check_branch
      %16 = sbr.rel (0) target = $region5
    $region4: #{tpu_custom_call.1} parent=1 // pred_region
      %s18 = ssub.s32 128, 128
      %19 = vsyncadd [#allocation5], %s18
      %s20 = sshll.u32 [#allocation4], 4
      %s21 = int_to_ptr.vmem [resolvable:$true] %s20
      %26 = dma.hbm_to_vmem [thread:$0]  %s0, 128, %s21, [#allocation5], 64, 64, 4
    $region5: #{tpu_custom_call.1} parent=1 // pred_fallthru
      _
    // Predicated region
    $region6: #{tpu_custom_call.1} parent=1 // pred_check
      _
    $region7: #{tpu_custom_call.1} parent=1 // pred_check_branch
      %28 = sbr.rel (0) target = $region9
    $region8: #{tpu_custom_call.1} parent=1 // pred_region
      %s30 = ssub.s32 1024, 1024
      %31 = vsyncadd [#allocation8], %s30
      %s32 = sshll.u32 [#allocation7], 4
      %s33 = int_to_ptr.vmem [resolvable:$true] %s32
      %38 = dma.hbm_to_vmem [thread:$0]  %s1, 1024, %s33, [#allocation8], 64, 64, 4
    $region9: #{tpu_custom_call.1} parent=1 // pred_fallthru
      _
    // Predicated region
    $region10: #{tpu_custom_call.1} parent=1 // pred_check
      _
    $region11: #{tpu_custom_call.1} parent=1 // pred_check_branch
      %40 = sbr.rel (0) target = $region13
    $region12: #{tpu_custom_call.1} parent=1 // pred_region
      %s42 = ssub.s32 1024, 1024
      %43 = vsyncadd [#allocation8], %s42
      %s44 = sshll.u32 [#allocation9], 4
      %s45 = int_to_ptr.vmem [resolvable:$true] %s44
      %50 = dma.hbm_to_vmem [thread:$0]  %s2, 1024, %s45, [#allocation8], 64, 64, 4
    $region13: #{tpu_custom_call.1} parent=1 // pred_fallthru
      _
    // Predicated region
    $region14: #{tpu_custom_call.1} parent=1 // pred_check
      _
    $region15: #{tpu_custom_call.1} parent=1 // pred_check_branch
      %52 = sbr.rel (0) target = $region17
    $region16: #{tpu_custom_call.1} parent=1 // pred_region
      _
    $region17: #{tpu_custom_call.1} parent=1 // pred_fallthru
      _
    // Predicated region
    $region18: #{tpu_custom_call.1} parent=1 // pred_check
      _
    $region19: #{tpu_custom_call.1} parent=1 // pred_check_branch
      %54 = sbr.rel (0) target = $region21
    $region20: #{tpu_custom_call.1} parent=1 // pred_region
      _
    $region21: #{tpu_custom_call.1} parent=1 // pred_fallthru
      _
    // Predicated region
    $region22: #{tpu_custom_call.1} parent=1 // pred_check
      _
    $region23: #{tpu_custom_call.1} parent=1 // pred_check_branch
      %56 = sbr.rel (0) target = $region25
    $region24: #{tpu_custom_call.1} parent=1 // pred_region
      _
    $region25: #{tpu_custom_call.1} parent=1 // pred_fallthru
      _
    // Predicated region
    $region26: #{tpu_custom_call.1} parent=1 // pred_check
      _
    $region27: #{tpu_custom_call.1} parent=1 // pred_check_branch
      %58 = sbr.rel (0) target = $region29
    $region28: #{tpu_custom_call.1} parent=1 // pred_region
      _
    $region29: #{tpu_custom_call.1} parent=1 // pred_fallthru
      _
    // Predicated region
    $region30: #{tpu_custom_call.1} parent=1 // pred_check
      _
    $region31: #{tpu_custom_call.1} parent=1 // pred_check_branch
      %60 = sbr.rel (0) target = $region33
    $region32: #{tpu_custom_call.1} parent=1 // pred_region
      %61 = dma.done [#allocation5], 128
    $region33: #{tpu_custom_call.1} parent=1 // pred_fallthru
      _
    // Predicated region
    $region34: #{tpu_custom_call.1} parent=1 // pred_check
      _
    $region35: #{tpu_custom_call.1} parent=1 // pred_check_branch
      %63 = sbr.rel (0) target = $region37
    $region36: #{tpu_custom_call.1} parent=1 // pred_region
      %64 = dma.done [#allocation8], 1024
    $region37: #{tpu_custom_call.1} parent=1 // pred_fallthru
      _
    // Predicated region
    $region38: #{tpu_custom_call.1} parent=1 // pred_check
      _
    $region39: #{tpu_custom_call.1} parent=1 // pred_check_branch
      %66 = sbr.rel (0) target = $region41
    $region40: #{tpu_custom_call.1} parent=1 // pred_region
      %67 = dma.done [#allocation8], 1024
    $region41: #{tpu_custom_call.1} parent=1 // pred_fallthru
      _
    %p69 = scmp.eq.s32.totalorder 0, 0
    // Predicated region
    $region42: #{tpu_custom_call.1} parent=1 // pred_check
      %p70 = pneg %p69
    $region43: #{tpu_custom_call.1} parent=1 // pred_check_branch
      %72 = sbr.rel (%p70) target = $region45
    $region44: #{tpu_custom_call.1} parent=1 // pred_region
      %73 = vst [vmem:[#allocation2] sm:$0xff] 0.0
      %74 = vst [vmem:[#allocation2 + $0x8] sm:$0xff] 0.0
    $region45: #{tpu_custom_call.1} parent=1 // pred_fallthru
      _
    %p75 = scmp.eq.s32.totalorder 0, 0
    %p76 = pnand %p75, %p69
    %p77 = pneg %p76
    // Predicated region
    $region46: #{tpu_custom_call.1} parent=1 // pred_check
      _
    $region47: #{tpu_custom_call.1} parent=1 // pred_check_branch
      %79 = sbr.rel (%p76) target = $region49
    $region48: #{tpu_custom_call.1} parent=1 // pred_region
      %80 = vst [vmem:[#allocation3] sm:$0xff] 0.0
      %81 = vst [vmem:[#allocation3 + $0x8] sm:$0xff] 0.0
    $region49: #{tpu_custom_call.1} parent=1 // pred_fallthru
      _
    %v82 = vld [vmem:[#allocation2] sm:$0xff]
    %v83 = vld [vmem:[#allocation2 + $0x8] sm:$0xff]
    %v84 = vld [vmem:[#allocation4] sm:$0xf]
    %v85 = vld [vmem:[#allocation4 + $0x4] sm:$0xf]
    %v86 = vld [vmem:[#allocation7] sm:$0xf]
    %v87 = vld [vmem:[#allocation7 + $0x4] sm:$0xf]
    %v88 = vld [vmem:[#allocation7 + $0x8] sm:$0xf]
    %v89 = vld [vmem:[#allocation7 + $0xc] sm:$0xf]
    %v90 = vld [vmem:[#allocation7 + $0x10] sm:$0xf]
    %v91 = vld [vmem:[#allocation7 + $0x14] sm:$0xf]
    %v92 = vld [vmem:[#allocation7 + $0x18] sm:$0xf]
    %v93 = vld [vmem:[#allocation7 + $0x1c] sm:$0xf]
    %v94 = vld [vmem:[#allocation7 + $0x20] sm:$0xf]
    %v95 = vld [vmem:[#allocation7 + $0x24] sm:$0xf]
    %v96 = vld [vmem:[#allocation7 + $0x28] sm:$0xf]
    %v97 = vld [vmem:[#allocation7 + $0x2c] sm:$0xf]
    %v98 = vld [vmem:[#allocation7 + $0x30] sm:$0xf]
    %v99 = vld [vmem:[#allocation7 + $0x34] sm:$0xf]
    %v100 = vld [vmem:[#allocation7 + $0x38] sm:$0xf]
    %v101 = vld [vmem:[#allocation7 + $0x3c] sm:$0xf]
    %v104 = vunpack.c.l.b16 %v84
    %v105 = vunpack.c.l.b16 %v85
    %v106 = vpack.c.b16 %v105, %v104
    %v124 = vunpack.c.l.b16 %v86
    %v125 = vunpack.c.l.b16 %v87
    %v126 = vunpack.c.l.b16 %v88
    %v127 = vunpack.c.l.b16 %v89
    %v128 = vunpack.c.l.b16 %v90
    %v129 = vunpack.c.l.b16 %v91
    %v130 = vunpack.c.l.b16 %v92
    %v131 = vunpack.c.l.b16 %v93
    %v132 = vunpack.c.l.b16 %v94
    %v133 = vunpack.c.l.b16 %v95
    %v134 = vunpack.c.l.b16 %v96
    %v135 = vunpack.c.l.b16 %v97
    %v136 = vunpack.c.l.b16 %v98
    %v137 = vunpack.c.l.b16 %v99
    %v138 = vunpack.c.l.b16 %v100
    %v139 = vunpack.c.l.b16 %v101
    %v140 = vpack.c.b16 %v125, %v124
    %v141 = vpack.c.b16 %v127, %v126
    %v142 = vpack.c.b16 %v129, %v128
    %v143 = vpack.c.b16 %v131, %v130
    %v144 = vpack.c.b16 %v133, %v132
    %v145 = vpack.c.b16 %v135, %v134
    %v146 = vpack.c.b16 %v137, %v136
    %v147 = vpack.c.b16 %v139, %v138
    %156 = vmatprep.subr.bf16.mxu0 0
    %157 = vmatpush1.bf16.msra.mxu0 %v140
    %158 = vmatprep.subr.bf16.mxu0 0
    %159 = vmatpush1.bf16.msra.mxu0 %v141
    %160 = vmatprep.subr.bf16.mxu0 0
    %161 = vmatpush1.bf16.msra.mxu0 %v142
    %162 = vmatprep.subr.bf16.mxu0 0
    %163 = vmatpush1.bf16.msra.mxu0 %v143
    %164 = vmatprep.subr.bf16.mxu0 0
    %165 = vmatpush1.bf16.msra.mxu0 %v144
    %166 = vmatprep.subr.bf16.mxu0 0
    %167 = vmatpush1.bf16.msra.mxu0 %v145
    %168 = vmatprep.subr.bf16.mxu0 0
    %169 = vmatpush1.bf16.msra.mxu0 %v146
    %170 = vmatprep.subr.bf16.mxu0 0
    %171 = vmatpush1.bf16.msra.mxu0 %v147
    %172 = vmatprep.subr.bf16.mxu0 0
    %173 = vmatpush1.bf16.msra.mxu0 0
    %174 = vmatprep.subr.bf16.mxu0 0
    %175 = vmatpush1.bf16.msra.mxu0 0
    %176 = vmatprep.subr.bf16.mxu0 0
    %177 = vmatpush1.bf16.msra.mxu0 0
    %178 = vmatprep.subr.bf16.mxu0 0
    %179 = vmatpush1.bf16.msra.mxu0 0
    %180 = vmatprep.subr.bf16.mxu0 0
    %181 = vmatpush1.bf16.msra.mxu0 0
    %182 = vmatprep.subr.bf16.mxu0 0
    %183 = vmatpush1.bf16.msra.mxu0 0
    %184 = vmatprep.subr.bf16.mxu0 0
    %185 = vmatpush1.bf16.msra.mxu0 0
    %186 = vmatprep.subr.bf16.mxu0 0
    %187 = vmatpush1.bf16.msra.mxu0 0
    %188 = vmatprep.mubr.bf16.mxu0 0
    %189 = vmatmul.mubr.bf16.gmra.mrb[0].mxu0 %v106
    %v190 = vpop.f32.mrb[0].mxu0
    %v191 = vadd.f32 0.0, %v190
    %v192 = vpop.f32.mrb[0].mxu0
    %v193 = vpop.f32.mrb[0].mxu0
    %v194 = vadd.f32 0.0, %v193
    %v195 = vpop.f32.mrb[0].mxu0
    %196 = vdwg.mxu0
    %v197 = vadd.f32 %v82, %v191
    %v198 = vadd.f32 %v83, %v194
    %199 = vst [vmem:[#allocation2] sm:$0xff] %v197
    %200 = vst [vmem:[#allocation2 + $0x8] sm:$0xff] %v198
    // Predicated region
    $region50: #{tpu_custom_call.1} parent=1 // pred_check
      %p201 = pneg %p69
    $region51: #{tpu_custom_call.1} parent=1 // pred_check_branch
      %203 = sbr.rel (%p201) target = $region53
    $region52: #{tpu_custom_call.1} parent=1 // pred_region
      %v204 = vld [vmem:[#allocation2] sm:$0xff]
      %v205 = vld [vmem:[#allocation2 + $0x8] sm:$0xff]
      %v206 = vadd.f32 %v204, %v205
      %v207 = vrot.slane %v206, 4
      %v208 = vadd.f32 %v206, %v207
      %v209 = vrot.slane %v208, 2
      %v210 = vadd.f32 %v208, %v209
      %v211 = vrot.slane %v210, 1
      %v212 = vadd.f32 %v210, %v211
      %v213 = vmul.f32 %v212, 0.125
      %v214 = vmul.f32 %v204, %v204
      %v215 = vmul.f32 %v205, %v205
      %v216 = vadd.f32 %v214, %v215
      %v217 = vrot.slane %v216, 4
      %v218 = vadd.f32 %v216, %v217
      %v219 = vrot.slane %v218, 2
      %v220 = vadd.f32 %v218, %v219
      %v221 = vrot.slane %v220, 1
      %v222 = vadd.f32 %v220, %v221
      %v223 = vmul.f32 %v222, 0.125
      %v224 = vmul.f32 %v213, %v213
      %v225 = vsub.f32 %v223, %v224
      %v226 = vsub.f32 %v204, %v213
      %v227 = vsub.f32 %v205, %v213
      %v228 = vadd.f32 %v225, 1e-05
      %v229 = vrsqrt.pop %v228
      %v230 = vmul.f32 %v226, %v229
      %v231 = vmul.f32 %v227, %v229
      %v232 = vld [vmem:[%s3] sm:$0x1]
      %v234 = vlaneseq
      %v235 = vshrl.u32 %v234, 7
      %v236 = vsub.s32 0, %v235
      %v237 = vrot.slane %v232, %v236
      %v239 = vmul.f32 %v230, %v237
      %v240 = vmul.f32 %v231, %v237
      %v241 = vld [vmem:[%s4] sm:$0x1]
      %v243 = vlaneseq
      %v244 = vshrl.u32 %v243, 7
      %v245 = vsub.s32 0, %v244
      %v246 = vrot.slane %v241, %v245
      %v248 = vadd.f32 %v239, %v246
      %v249 = vadd.f32 %v240, %v246
      %v250 = vmax.f32 %v248, 0.0
      %v251 = vmax.f32 %v249, 0.0
      %v252 = vlaneseq
      %v253 = vshrl.u32 %v252, 7
      %v254 = vadd.s32 %v253, 8
      %vm255 = vcmp.lt.s32.totalorder %v253, 8
      %vm256 = vcmp.lt.s32.totalorder %v254, 8
      %v257 = vsel %vm255, 1, 0
      %v258 = vsel %vm256, 1, 0
      %vm259 = vcmp.eq.s32.totalorder %v257, 1
      %vm260 = vcmp.eq.s32.totalorder %v258, 1
      %v261 = vsel %vm259, %v250, 0.0
      %v262 = vsel %vm260, %v251, 0.0
      %v263 = vld [vmem:[#allocation3] sm:$0xff]
      %v264 = vld [vmem:[#allocation3 + $0x8] sm:$0xff]
      %v265 = vpack.c.bf16 %v262, %v261
      %v266 = vld [vmem:[#allocation9] sm:$0xf]
      %v267 = vld [vmem:[#allocation9 + $0x4] sm:$0xf]
      %v268 = vld [vmem:[#allocation9 + $0x8] sm:$0xf]
      %v269 = vld [vmem:[#allocation9 + $0xc] sm:$0xf]
      %v270 = vld [vmem:[#allocation9 + $0x10] sm:$0xf]
      %v271 = vld [vmem:[#allocation9 + $0x14] sm:$0xf]
      %v272 = vld [vmem:[#allocation9 + $0x18] sm:$0xf]
      %v273 = vld [vmem:[#allocation9 + $0x1c] sm:$0xf]
      %v274 = vld [vmem:[#allocation9 + $0x20] sm:$0xf]
      %v275 = vld [vmem:[#allocation9 + $0x24] sm:$0xf]
      %v276 = vld [vmem:[#allocation9 + $0x28] sm:$0xf]
      %v277 = vld [vmem:[#allocation9 + $0x2c] sm:$0xf]
      %v278 = vld [vmem:[#allocation9 + $0x30] sm:$0xf]
      %v279 = vld [vmem:[#allocation9 + $0x34] sm:$0xf]
      %v280 = vld [vmem:[#allocation9 + $0x38] sm:$0xf]
      %v281 = vld [vmem:[#allocation9 + $0x3c] sm:$0xf]
      %v298 = vunpack.c.l.b16 %v266
      %v299 = vunpack.c.l.b16 %v267
      %v300 = vunpack.c.l.b16 %v268
      %v301 = vunpack.c.l.b16 %v269
      %v302 = vunpack.c.l.b16 %v270
      %v303 = vunpack.c.l.b16 %v271
      %v304 = vunpack.c.l.b16 %v272
      %v305 = vunpack.c.l.b16 %v273
      %v306 = vunpack.c.l.b16 %v274
      %v307 = vunpack.c.l.b16 %v275
      %v308 = vunpack.c.l.b16 %v276
      %v309 = vunpack.c.l.b16 %v277
      %v310 = vunpack.c.l.b16 %v278
      %v311 = vunpack.c.l.b16 %v279
      %v312 = vunpack.c.l.b16 %v280
      %v313 = vunpack.c.l.b16 %v281
      %v314 = vpack.c.b16 %v299, %v298
      %v315 = vpack.c.b16 %v301, %v300
      %v316 = vpack.c.b16 %v303, %v302
      %v317 = vpack.c.b16 %v305, %v304
      %v318 = vpack.c.b16 %v307, %v306
      %v319 = vpack.c.b16 %v309, %v308
      %v320 = vpack.c.b16 %v311, %v310
      %v321 = vpack.c.b16 %v313, %v312
      %330 = vmatprep.subr.bf16.mxu0 0
      %331 = vmatpush1.bf16.msra.mxu0 %v314
      %332 = vmatprep.subr.bf16.mxu0 0
      %333 = vmatpush1.bf16.msra.mxu0 %v315
      %334 = vmatprep.subr.bf16.mxu0 0
      %335 = vmatpush1.bf16.msra.mxu0 %v316
      %336 = vmatprep.subr.bf16.mxu0 0
      %337 = vmatpush1.bf16.msra.mxu0 %v317
      %338 = vmatprep.subr.bf16.mxu0 0
      %339 = vmatpush1.bf16.msra.mxu0 %v318
      %340 = vmatprep.subr.bf16.mxu0 0
      %341 = vmatpush1.bf16.msra.mxu0 %v319
      %342 = vmatprep.subr.bf16.mxu0 0
      %343 = vmatpush1.bf16.msra.mxu0 %v320
      %344 = vmatprep.subr.bf16.mxu0 0
      %345 = vmatpush1.bf16.msra.mxu0 %v321
      %346 = vmatprep.subr.bf16.mxu0 0
      %347 = vmatpush1.bf16.msra.mxu0 0
      %348 = vmatprep.subr.bf16.mxu0 0
      %349 = vmatpush1.bf16.msra.mxu0 0
      %350 = vmatprep.subr.bf16.mxu0 0
      %351 = vmatpush1.bf16.msra.mxu0 0
      %352 = vmatprep.subr.bf16.mxu0 0
      %353 = vmatpush1.bf16.msra.mxu0 0
      %354 = vmatprep.subr.bf16.mxu0 0
      %355 = vmatpush1.bf16.msra.mxu0 0
      %356 = vmatprep.subr.bf16.mxu0 0
      %357 = vmatpush1.bf16.msra.mxu0 0
      %358 = vmatprep.subr.bf16.mxu0 0
      %359 = vmatpush1.bf16.msra.mxu0 0
      %360 = vmatprep.subr.bf16.mxu0 0
      %361 = vmatpush1.bf16.msra.mxu0 0
      %362 = vmatprep.mubr.bf16.mxu0 0
      %363 = vmatmul.mubr.bf16.gmra.mrb[0].mxu0 %v265
      %v364 = vpop.f32.mrb[0].mxu0
      %v365 = vadd.f32 0.0, %v364
      %v366 = vpop.f32.mrb[0].mxu0
      %v367 = vpop.f32.mrb[0].mxu0
      %v368 = vadd.f32 0.0, %v367
      %v369 = vpop.f32.mrb[0].mxu0
      %370 = vdwg.mxu0
      %v371 = vadd.f32 %v263, %v365
      %v372 = vadd.f32 %v264, %v368
      %373 = vst [vmem:[#allocation3] sm:$0xff] %v371
      %374 = vst [vmem:[#allocation3 + $0x8] sm:$0xff] %v372
    $region53: #{tpu_custom_call.1} parent=1 // pred_fallthru
      _
    // Predicated region
    $region54: #{tpu_custom_call.1} parent=1 // pred_check
      _
    $region55: #{tpu_custom_call.1} parent=1 // pred_check_branch
      %376 = sbr.rel (%p76) target = $region57
    $region56: #{tpu_custom_call.1} parent=1 // pred_region
      %v377 = vld [vmem:[#allocation3] sm:$0xff]
      %v378 = vld [vmem:[#allocation3 + $0x8] sm:$0xff]
      %v379 = vadd.f32 %v377, %v378
      %v380 = vrot.slane %v379, 4
      %v381 = vadd.f32 %v379, %v380
      %v382 = vrot.slane %v381, 2
      %v383 = vadd.f32 %v381, %v382
      %v384 = vrot.slane %v383, 1
      %v385 = vadd.f32 %v383, %v384
      %v386 = vmul.f32 %v385, 0.125
      %v387 = vmul.f32 %v377, %v377
      %v388 = vmul.f32 %v378, %v378
      %v389 = vadd.f32 %v387, %v388
      %v390 = vrot.slane %v389, 4
      %v391 = vadd.f32 %v389, %v390
      %v392 = vrot.slane %v391, 2
      %v393 = vadd.f32 %v391, %v392
      %v394 = vrot.slane %v393, 1
      %v395 = vadd.f32 %v393, %v394
      %v396 = vmul.f32 %v395, 0.125
      %v397 = vmul.f32 %v386, %v386
      %v398 = vsub.f32 %v396, %v397
      %v399 = vsub.f32 %v377, %v386
      %v400 = vsub.f32 %v378, %v386
      %v401 = vadd.f32 %v398, 1e-05
      %v402 = vrsqrt.pop %v401
      %v403 = vmul.f32 %v399, %v402
      %v404 = vmul.f32 %v400, %v402
      %v405 = vld [vmem:[%s5] sm:$0x1]
      %v407 = vlaneseq
      %v408 = vshrl.u32 %v407, 7
      %v409 = vsub.s32 0, %v408
      %v410 = vrot.slane %v405, %v409
      %v412 = vmul.f32 %v403, %v410
      %v413 = vmul.f32 %v404, %v410
      %v414 = vld [vmem:[%s6] sm:$0x1]
      %v416 = vlaneseq
      %v417 = vshrl.u32 %v416, 7
      %v418 = vsub.s32 0, %v417
      %v419 = vrot.slane %v414, %v418
      %v421 = vadd.f32 %v412, %v419
      %v422 = vadd.f32 %v413, %v419
      %423 = vst [vmem:[#allocation10] sm:$0xff] %v421
      %424 = vst [vmem:[#allocation10 + $0x8] sm:$0xff] %v422
    $region57: #{tpu_custom_call.1} parent=1 // pred_fallthru
      _
    // Predicated region
    $region58: #{tpu_custom_call.1} parent=1 // pred_check
      _
    $region59: #{tpu_custom_call.1} parent=1 // pred_check_branch
      %426 = sbr.rel (0) target = $region61
    $region60: #{tpu_custom_call.1} parent=1 // pred_region
      %s428 = ssub.s32 256, 256
      %429 = vsyncadd [#allocation6], %s428
      %s430 = sshll.u32 [#allocation10], 4
      %s431 = int_to_ptr.vmem [resolvable:$true] %s430
      %436 = dma.vmem_to_hbm [thread:$0]  %s431, 256, %s7, [#allocation6], 128, 128, 8
    $region61: #{tpu_custom_call.1} parent=1 // pred_fallthru
      _
    // Predicated region
    $region62: #{tpu_custom_call.1} parent=1 // pred_check
      _
    $region63: #{tpu_custom_call.1} parent=1 // pred_check_branch
      %438 = sbr.rel (0) target = $region65
    $region64: #{tpu_custom_call.1} parent=1 // pred_region
      %439 = dma.done [#allocation6], 256
    $region65: #{tpu_custom_call.1} parent=1 // pred_fallthru
      _
    %440 = vsyncpa [#allocation5], 1
    %441 = vsyncpa [#allocation8], 1
    %442 = vsyncpa [#allocation6], 1

</llo_original>
